<compile_context>
chip_gen: v5e
topology: v5e:2x2
jax: 0.10.0
libtpu: 0.0.40
codegen_flags: <defaults>
</compile_context>

<pallas_src>
import functools

import jax
import jax.numpy as jnp
from jax import lax
from jax.experimental import pallas as pl
from jax.experimental.pallas import tpu as pltpu


def _round_up(x, m):
    return ((x + m - 1) // m) * m


def _choose_batch_block(N, HW, target_lanes=2048):
    """Pick how many batch elements to process per grid step.

    - Cap the block so one step works on roughly `target_lanes` lanes
      (amortizes per-step overhead, makes DMAs bandwidth-bound).
    - Keep at least 2 grid steps whenever N >= 2 so both v7x TensorCores
      get work under dimension_semantics=("parallel",).
    - Require the block to divide N (no partial blocks).
    """
    cap = max(1, target_lanes // max(HW, 1))
    if N >= 2:
        cap = min(cap, max(1, N // 2))
    nb = 1
    for d in range(1, min(N, cap) + 1):
        if N % d == 0:
            nb = d
    return nb


def conv3x3_relu_kernel(x_ref, w_ref, b_ref, o_ref, xs_ref, *, H, W, base, nb):
    """One batch block (nb images) per grid step.

    x_ref : (nb, Cin, H*W)     flat images; channels on sublanes, spatial on lanes
    w_ref : (9, Cout, Cin)     per-tap weight matrices, tap index = kh*3 + kw
    b_ref : (Cout, 1)          bias column
    o_ref : (nb, Cout, H*W)    lane-dense, channels-first output
    xs_ref: (nb, Cin, padflat) zero-halo scratch; image n sits at lane `base`
    """
    Cin = x_ref.shape[1]
    Cout = o_ref.shape[1]
    HW = H * W
    padflat = xs_ref.shape[2]
    halo_hi = padflat - (base + HW)

    x = x_ref[...]  # (nb, Cin, HW)

    # --- Fused zero padding: zero ONLY the halo (both slice boundaries are
    #     lane-aligned multiples of 128), then drop each image into its slot.
    #     The [base, base+HW) image region is fully overwritten below, so it
    #     never needs zeroing.  Re-done every step: safe under "parallel".
    xs_ref[:, :, :base] = jnp.zeros((nb, Cin, base), jnp.float32)
    xs_ref[:, :, base + HW:] = jnp.zeros((nb, Cin, halo_hi), jnp.float32)
    for n in range(nb):
        xs_ref[n, :, base:base + HW] = x[n].astype(jnp.float32)

    # Column-validity masks for horizontally shifted taps (kill the row-wrap
    # garbage the flat layout would otherwise pick up).  Vertical out-of-range
    # taps read the zero halo instead, so they need no mask.
    col = lax.broadcasted_iota(jnp.int32, (1, HW), 1) % W
    mask_l = (col != 0).astype(jnp.float32)        # kw == 0: left neighbor
    mask_r = (col != (W - 1)).astype(jnp.float32)  # kw == 2: right neighbor

    bias = b_ref[...].astype(jnp.float32)          # (Cout, 1)

    # --- No-im2col accumulation: 9 tiny matmuls per image, no patch matrix,
    #     no patch stores/reloads.  Accumulate in f32 register values.
    accs = [jnp.zeros((Cout, HW), jnp.float32) for _ in range(nb)]
    for kh in range(3):
        for kw in range(3):
            t = kh * 3 + kw
            start = base + (kh - 1) * W + (kw - 1)
            w_t = w_ref[t].astype(jnp.float32)     # (Cout, Cin)
            for n in range(nb):
                sl = xs_ref[n, :, start:start + HW]   # (Cin, HW)
                if kw == 0:
                    sl = sl * mask_l
                elif kw == 2:
                    sl = sl * mask_r
                accs[n] = accs[n] + jnp.dot(
                    w_t, sl, preferred_element_type=jnp.float32)

    # Lane-dense (Cout, HW) full-width stores, channels-first, per image slot.
    for n in range(nb):
        o_ref[n] = jnp.maximum(accs[n] + bias, 0.0).astype(o_ref.dtype)


def conv_relu_pallas(x_nchw, weight, bias, *, batch_block=None):
    """x_nchw: (N, Cin, H, W); weight: (Cout, Cin, 3, 3); bias: (Cout,)."""
    N, Cin, H, W = x_nchw.shape
    Cout = weight.shape[0]
    HW = H * W

    # Scratch geometry: image sits at lane offset `base` (lane-aligned and
    # >= W+1 so the most-negative tap offset stays in-bounds); padflat covers
    # the most-positive tap offset, rounded up to a lane multiple.
    # (A 128-multiple row stride to lane-align vertical taps is not worth it
    #  at W=16 -- it would 8x the scratch -- see review; revisit for W >= 128.)
    base = _round_up(W + 1, 128)
    padflat = _round_up(base + HW + W + 1, 128)

    Nb = batch_block if batch_block is not None else _choose_batch_block(N, HW)
    assert N % Nb == 0, "batch block must divide N"

    # Free reshape only -- no transposes, no jnp.pad on the activations in HBM.
    x_flat = x_nchw.reshape(N, Cin, HW)
    # One-time packing of the tiny weight tensor into per-tap matrices.
    w_taps = jnp.transpose(weight, (2, 3, 0, 1)).reshape(9, Cout, Cin)
    b_col = bias.reshape(Cout, 1)

    kernel = functools.partial(conv3x3_relu_kernel, H=H, W=W, base=base, nb=Nb)

    out_flat = pl.pallas_call(
        kernel,
        out_shape=jax.ShapeDtypeStruct((N, Cout, HW), x_nchw.dtype),
        grid_spec=pltpu.PrefetchScalarGridSpec(
            num_scalar_prefetch=0,
            grid=(N // Nb,),
            in_specs=[
                pl.BlockSpec((Nb, Cin, HW), lambda b: (b, 0, 0)),
                pl.BlockSpec((9, Cout, Cin), lambda b: (0, 0, 0)),
                pl.BlockSpec((Cout, 1), lambda b: (0, 0)),
            ],
            out_specs=pl.BlockSpec((Nb, Cout, HW), lambda b: (b, 0, 0)),
            scratch_shapes=[
                pltpu.VMEM((Nb, Cin, padflat), jnp.float32),
            ],
        ),
        compiler_params=pltpu.CompilerParams(
            dimension_semantics=("parallel",),
        ),
    )(x_flat, w_taps, b_col)

    # Already channels-first; just un-flatten the spatial axis (free reshape).
    return out_flat.reshape(N, Cout, H, W)


def conv_relu_reference(x_nchw, weight, bias):
    out = lax.conv_general_dilated(
        x_nchw, weight,
        window_strides=(1, 1),
        padding=((1, 1), (1, 1)),
        dimension_numbers=("NCHW", "OIHW", "NCHW"),
    )
    out = out + bias[None, :, None, None]
    return jnp.maximum(out, 0.0)


if __name__ == "__main__":
    key = jax.random.PRNGKey(0)
    k_x, k_w, k_b = jax.random.split(key, 3)

    N, Cin, H, W = 2, 4, 16, 16
    Cout = 8

    x = jax.random.normal(k_x, (N, Cin, H, W), dtype=jnp.float32)
    # PyTorch Conv2d default init: U(-k, k), k = 1/sqrt(Cin*3*3)
    fan_in = Cin * 3 * 3
    bound = 1.0 / (fan_in ** 0.5)
    weight = jax.random.uniform(
        k_w, (Cout, Cin, 3, 3), dtype=jnp.float32, minval=-bound, maxval=bound
    )
    bias = jax.random.uniform(
        k_b, (Cout,), dtype=jnp.float32, minval=-bound, maxval=bound
    )

    out = conv_relu_pallas(x, weight, bias)
    out = jax.block_until_ready(out)

    ref = conv_relu_reference(x, weight, bias)
    assert out.shape == (N, Cout, H, W)
    assert jnp.allclose(out, ref, atol=1e-5, rtol=1e-5), "mismatch vs reference conv"

    print("KERNEL_OK")
</pallas_src>

<mosaic_0001>
module attributes {stable_mosaic.version = 11 : i64} {
  func.func @conv3x3_relu_kernel(%arg0: i32, %arg1: memref<1x4x256xf32, #tpu.memory_space<vmem>>, %arg2: memref<9x8x4xf32, #tpu.memory_space<vmem>>, %arg3: memref<8x1xf32, #tpu.memory_space<vmem>>, %arg4: memref<1x8x256xf32, #tpu.memory_space<vmem>>, %arg5: memref<1x4x512xf32, #tpu.memory_space<vmem>>) attributes {dimension_semantics = [#tpu.dimension_semantics<parallel>], iteration_bounds = array<i64: 2>, scalar_prefetch = 0 : i64, scratch_operands = 1 : i64, tpu.core_type = #tpu.core_type<tc>, window_params = [{transform_indices = @transform_0, window_bounds = array<i64: 1, 4, 256>}, {pipeline_mode = #tpu.pipeline_mode<synchronous>, transform_indices = @transform_1, window_bounds = array<i64: 9, 8, 4>}, {pipeline_mode = #tpu.pipeline_mode<synchronous>, transform_indices = @transform_2, window_bounds = array<i64: 8, 1>}, {transform_indices = @transform_3, window_bounds = array<i64: 1, 8, 256>}]} {
    %c0 = arith.constant 0 : index
    %c0_0 = arith.constant 0 : index
    %c0_1 = arith.constant 0 : index
    %0 = vector.load %arg1[%c0, %c0_0, %c0_1] : memref<1x4x256xf32, #tpu.memory_space<vmem>>, vector<1x4x256xf32>
    %cst = arith.constant 0.000000e+00 : f32
    %1 = vector.broadcast %cst : f32 to vector<1x4x128xf32>
    %c0_2 = arith.constant 0 : index
    %c0_3 = arith.constant 0 : index
    %c0_4 = arith.constant 0 : index
    %2 = vector.load %arg5[%c0_2, %c0_3, %c0_4] : memref<1x4x512xf32, #tpu.memory_space<vmem>>, vector<1x4x128xf32>
    tpu.vector_store %arg5[%c0_2, %c0_3, %c0_4], %1 {strides = array<i32>} : memref<1x4x512xf32, #tpu.memory_space<vmem>>, vector<1x4x128xf32>,
    %cst_5 = arith.constant 0.000000e+00 : f32
    %3 = vector.broadcast %cst_5 : f32 to vector<1x4x128xf32>
    %c0_6 = arith.constant 0 : index
    %c0_7 = arith.constant 0 : index
    %c384 = arith.constant 384 : index
    %4 = vector.load %arg5[%c0_6, %c0_7, %c384] : memref<1x4x512xf32, #tpu.memory_space<vmem>>, vector<1x4x128xf32>
    tpu.vector_store %arg5[%c0_6, %c0_7, %c384], %3 {strides = array<i32>} : memref<1x4x512xf32, #tpu.memory_space<vmem>>, vector<1x4x128xf32>,
    %5 = vector.shape_cast %0 : vector<1x4x256xf32> to vector<4x256xf32>
    %c0_8 = arith.constant 0 : index
    %c0_9 = arith.constant 0 : index
    %c128 = arith.constant 128 : index
    %6 = vector.load %arg5[%c0_8, %c0_9, %c128] : memref<1x4x512xf32, #tpu.memory_space<vmem>>, vector<1x4x256xf32>
    %7 = vector.shape_cast %6 : vector<1x4x256xf32> to vector<4x256xf32>
    %8 = vector.shape_cast %5 : vector<4x256xf32> to vector<1x4x256xf32>
    tpu.vector_store %arg5[%c0_8, %c0_9, %c128], %8 {strides = array<i32>} : memref<1x4x512xf32, #tpu.memory_space<vmem>>, vector<1x4x256xf32>,
    %9 = tpu.iota {dimensions = array<i32: 1>} : vector<1x256xi32>
    %c16_i32 = arith.constant 16 : i32
    %c0_i32 = arith.constant 0 : i32
    %10 = arith.cmpi eq, %c16_i32, %c0_i32 : i32
    %c1_i32 = arith.constant 1 : i32
    %11 = arith.select %10, %c1_i32, %c16_i32 : i32
    %12 = vector.broadcast %11 : i32 to vector<1x256xi32>
    %13 = arith.remsi %9, %12 : vector<1x256xi32>
    %c0_i32_10 = arith.constant 0 : i32
    %14 = vector.broadcast %c0_i32_10 : i32 to vector<1x256xi32>
    %15 = arith.cmpi ne, %13, %14 : vector<1x256xi32>
    %c0_i32_11 = arith.constant 0 : i32
    %16 = vector.broadcast %c0_i32_11 : i32 to vector<1x256xi32>
    %17 = arith.cmpi slt, %13, %16 : vector<1x256xi32>
    %c0_i32_12 = arith.constant 0 : i32
    %18 = arith.cmpi slt, %11, %c0_i32_12 : i32
    %19 = vector.broadcast %18 : i1 to vector<1x256xi1>
    %20 = vector.broadcast %19 : vector<1x256xi1> to vector<1x256xi1>
    %21 = arith.xori %17, %20 : vector<1x256xi1>
    %22 = arith.andi %21, %15 : vector<1x256xi1>
    %23 = vector.broadcast %11 : i32 to vector<1x256xi32>
    %24 = arith.addi %13, %23 : vector<1x256xi32>
    %25 = arith.select %22, %24, %13 : vector<1x256xi1>, vector<1x256xi32>
    %c0_i32_13 = arith.constant 0 : i32
    %26 = vector.broadcast %c0_i32_13 : i32 to vector<1x256xi32>
    %27 = arith.cmpi ne, %25, %26 : vector<1x256xi32>
    %28 = arith.extui %27 : vector<1x256xi1> to vector<1x256xi32>
    %29 = arith.sitofp %28 : vector<1x256xi32> to vector<1x256xf32>
    %c15_i32 = arith.constant 15 : i32
    %30 = vector.broadcast %c15_i32 : i32 to vector<1x256xi32>
    %31 = arith.cmpi ne, %25, %30 : vector<1x256xi32>
    %32 = arith.extui %31 : vector<1x256xi1> to vector<1x256xi32>
    %33 = arith.sitofp %32 : vector<1x256xi32> to vector<1x256xf32>
    %c0_14 = arith.constant 0 : index
    %c0_15 = arith.constant 0 : index
    %34 = vector.load %arg3[%c0_14, %c0_15] : memref<8x1xf32, #tpu.memory_space<vmem>>, vector<8x1xf32>
    %cst_16 = arith.constant 0.000000e+00 : f32
    %35 = vector.broadcast %cst_16 : f32 to vector<8x256xf32>
    %c0_17 = arith.constant 0 : index
    %c0_18 = arith.constant 0 : index
    %c0_19 = arith.constant 0 : index
    %36 = vector.load %arg2[%c0_17, %c0_18, %c0_19] : memref<9x8x4xf32, #tpu.memory_space<vmem>>, vector<1x8x4xf32>
    %37 = vector.shape_cast %36 : vector<1x8x4xf32> to vector<8x4xf32>
    %c0_20 = arith.constant 0 : index
    %c0_21 = arith.constant 0 : index
    %c111 = arith.constant 111 : index
    %38 = vector.load %arg5[%c0_20, %c0_21, %c111] : memref<1x4x512xf32, #tpu.memory_space<vmem>>, vector<1x4x256xf32>
    %39 = vector.shape_cast %38 : vector<1x4x256xf32> to vector<4x256xf32>
    %40 = vector.broadcast %29 : vector<1x256xf32> to vector<4x256xf32>
    %41 = arith.mulf %39, %40 : vector<4x256xf32>
    %cst_22 = arith.constant dense<0.000000e+00> : vector<8x256xf32>
    %42 = tpu.matmul %37, %41, %cst_22 {dimension_numbers = #tpu.dot_dimension_numbers<[1], [0], [0], [1], [0, 0, 1, 1], [], []>} : vector<8x4xf32>, vector<4x256xf32>, vector<8x256xf32> -> vector<8x256xf32>
    %43 = arith.addf %35, %42 : vector<8x256xf32>
    %c1 = arith.constant 1 : index
    %c0_23 = arith.constant 0 : index
    %c0_24 = arith.constant 0 : index
    %44 = vector.load %arg2[%c1, %c0_23, %c0_24] : memref<9x8x4xf32, #tpu.memory_space<vmem>>, vector<1x8x4xf32>
    %45 = vector.shape_cast %44 : vector<1x8x4xf32> to vector<8x4xf32>
    %c0_25 = arith.constant 0 : index
    %c0_26 = arith.constant 0 : index
    %c112 = arith.constant 112 : index
    %46 = vector.load %arg5[%c0_25, %c0_26, %c112] : memref<1x4x512xf32, #tpu.memory_space<vmem>>, vector<1x4x256xf32>
    %47 = vector.shape_cast %46 : vector<1x4x256xf32> to vector<4x256xf32>
    %cst_27 = arith.constant dense<0.000000e+00> : vector<8x256xf32>
    %48 = tpu.matmul %45, %47, %cst_27 {dimension_numbers = #tpu.dot_dimension_numbers<[1], [0], [0], [1], [0, 0, 1, 1], [], []>} : vector<8x4xf32>, vector<4x256xf32>, vector<8x256xf32> -> vector<8x256xf32>
    %49 = arith.addf %43, %48 : vector<8x256xf32>
    %c2 = arith.constant 2 : index
    %c0_28 = arith.constant 0 : index
    %c0_29 = arith.constant 0 : index
    %50 = vector.load %arg2[%c2, %c0_28, %c0_29] : memref<9x8x4xf32, #tpu.memory_space<vmem>>, vector<1x8x4xf32>
    %51 = vector.shape_cast %50 : vector<1x8x4xf32> to vector<8x4xf32>
    %c0_30 = arith.constant 0 : index
    %c0_31 = arith.constant 0 : index
    %c113 = arith.constant 113 : index
    %52 = vector.load %arg5[%c0_30, %c0_31, %c113] : memref<1x4x512xf32, #tpu.memory_space<vmem>>, vector<1x4x256xf32>
    %53 = vector.shape_cast %52 : vector<1x4x256xf32> to vector<4x256xf32>
    %54 = vector.broadcast %33 : vector<1x256xf32> to vector<4x256xf32>
    %55 = arith.mulf %53, %54 : vector<4x256xf32>
    %cst_32 = arith.constant dense<0.000000e+00> : vector<8x256xf32>
    %56 = tpu.matmul %51, %55, %cst_32 {dimension_numbers = #tpu.dot_dimension_numbers<[1], [0], [0], [1], [0, 0, 1, 1], [], []>} : vector<8x4xf32>, vector<4x256xf32>, vector<8x256xf32> -> vector<8x256xf32>
    %57 = arith.addf %49, %56 : vector<8x256xf32>
    %c3 = arith.constant 3 : index
    %c0_33 = arith.constant 0 : index
    %c0_34 = arith.constant 0 : index
    %58 = vector.load %arg2[%c3, %c0_33, %c0_34] : memref<9x8x4xf32, #tpu.memory_space<vmem>>, vector<1x8x4xf32>
    %59 = vector.shape_cast %58 : vector<1x8x4xf32> to vector<8x4xf32>
    %c0_35 = arith.constant 0 : index
    %c0_36 = arith.constant 0 : index
    %c127 = arith.constant 127 : index
    %60 = vector.load %arg5[%c0_35, %c0_36, %c127] : memref<1x4x512xf32, #tpu.memory_space<vmem>>, vector<1x4x256xf32>
    %61 = vector.shape_cast %60 : vector<1x4x256xf32> to vector<4x256xf32>
    %62 = vector.broadcast %29 : vector<1x256xf32> to vector<4x256xf32>
    %63 = arith.mulf %61, %62 : vector<4x256xf32>
    %cst_37 = arith.constant dense<0.000000e+00> : vector<8x256xf32>
    %64 = tpu.matmul %59, %63, %cst_37 {dimension_numbers = #tpu.dot_dimension_numbers<[1], [0], [0], [1], [0, 0, 1, 1], [], []>} : vector<8x4xf32>, vector<4x256xf32>, vector<8x256xf32> -> vector<8x256xf32>
    %65 = arith.addf %57, %64 : vector<8x256xf32>
    %c4 = arith.constant 4 : index
    %c0_38 = arith.constant 0 : index
    %c0_39 = arith.constant 0 : index
    %66 = vector.load %arg2[%c4, %c0_38, %c0_39] : memref<9x8x4xf32, #tpu.memory_space<vmem>>, vector<1x8x4xf32>
    %67 = vector.shape_cast %66 : vector<1x8x4xf32> to vector<8x4xf32>
    %c0_40 = arith.constant 0 : index
    %c0_41 = arith.constant 0 : index
    %c128_42 = arith.constant 128 : index
    %68 = vector.load %arg5[%c0_40, %c0_41, %c128_42] : memref<1x4x512xf32, #tpu.memory_space<vmem>>, vector<1x4x256xf32>
    %69 = vector.shape_cast %68 : vector<1x4x256xf32> to vector<4x256xf32>
    %cst_43 = arith.constant dense<0.000000e+00> : vector<8x256xf32>
    %70 = tpu.matmul %67, %69, %cst_43 {dimension_numbers = #tpu.dot_dimension_numbers<[1], [0], [0], [1], [0, 0, 1, 1], [], []>} : vector<8x4xf32>, vector<4x256xf32>, vector<8x256xf32> -> vector<8x256xf32>
    %71 = arith.addf %65, %70 : vector<8x256xf32>
    %c5 = arith.constant 5 : index
    %c0_44 = arith.constant 0 : index
    %c0_45 = arith.constant 0 : index
    %72 = vector.load %arg2[%c5, %c0_44, %c0_45] : memref<9x8x4xf32, #tpu.memory_space<vmem>>, vector<1x8x4xf32>
    %73 = vector.shape_cast %72 : vector<1x8x4xf32> to vector<8x4xf32>
    %c0_46 = arith.constant 0 : index
    %c0_47 = arith.constant 0 : index
    %c129 = arith.constant 129 : index
    %74 = vector.load %arg5[%c0_46, %c0_47, %c129] : memref<1x4x512xf32, #tpu.memory_space<vmem>>, vector<1x4x256xf32>
    %75 = vector.shape_cast %74 : vector<1x4x256xf32> to vector<4x256xf32>
    %76 = vector.broadcast %33 : vector<1x256xf32> to vector<4x256xf32>
    %77 = arith.mulf %75, %76 : vector<4x256xf32>
    %cst_48 = arith.constant dense<0.000000e+00> : vector<8x256xf32>
    %78 = tpu.matmul %73, %77, %cst_48 {dimension_numbers = #tpu.dot_dimension_numbers<[1], [0], [0], [1], [0, 0, 1, 1], [], []>} : vector<8x4xf32>, vector<4x256xf32>, vector<8x256xf32> -> vector<8x256xf32>
    %79 = arith.addf %71, %78 : vector<8x256xf32>
    %c6 = arith.constant 6 : index
    %c0_49 = arith.constant 0 : index
    %c0_50 = arith.constant 0 : index
    %80 = vector.load %arg2[%c6, %c0_49, %c0_50] : memref<9x8x4xf32, #tpu.memory_space<vmem>>, vector<1x8x4xf32>
    %81 = vector.shape_cast %80 : vector<1x8x4xf32> to vector<8x4xf32>
    %c0_51 = arith.constant 0 : index
    %c0_52 = arith.constant 0 : index
    %c143 = arith.constant 143 : index
    %82 = vector.load %arg5[%c0_51, %c0_52, %c143] : memref<1x4x512xf32, #tpu.memory_space<vmem>>, vector<1x4x256xf32>
    %83 = vector.shape_cast %82 : vector<1x4x256xf32> to vector<4x256xf32>
    %84 = vector.broadcast %29 : vector<1x256xf32> to vector<4x256xf32>
    %85 = arith.mulf %83, %84 : vector<4x256xf32>
    %cst_53 = arith.constant dense<0.000000e+00> : vector<8x256xf32>
    %86 = tpu.matmul %81, %85, %cst_53 {dimension_numbers = #tpu.dot_dimension_numbers<[1], [0], [0], [1], [0, 0, 1, 1], [], []>} : vector<8x4xf32>, vector<4x256xf32>, vector<8x256xf32> -> vector<8x256xf32>
    %87 = arith.addf %79, %86 : vector<8x256xf32>
    %c7 = arith.constant 7 : index
    %c0_54 = arith.constant 0 : index
    %c0_55 = arith.constant 0 : index
    %88 = vector.load %arg2[%c7, %c0_54, %c0_55] : memref<9x8x4xf32, #tpu.memory_space<vmem>>, vector<1x8x4xf32>
    %89 = vector.shape_cast %88 : vector<1x8x4xf32> to vector<8x4xf32>
    %c0_56 = arith.constant 0 : index
    %c0_57 = arith.constant 0 : index
    %c144 = arith.constant 144 : index
    %90 = vector.load %arg5[%c0_56, %c0_57, %c144] : memref<1x4x512xf32, #tpu.memory_space<vmem>>, vector<1x4x256xf32>
    %91 = vector.shape_cast %90 : vector<1x4x256xf32> to vector<4x256xf32>
    %cst_58 = arith.constant dense<0.000000e+00> : vector<8x256xf32>
    %92 = tpu.matmul %89, %91, %cst_58 {dimension_numbers = #tpu.dot_dimension_numbers<[1], [0], [0], [1], [0, 0, 1, 1], [], []>} : vector<8x4xf32>, vector<4x256xf32>, vector<8x256xf32> -> vector<8x256xf32>
    %93 = arith.addf %87, %92 : vector<8x256xf32>
    %c8 = arith.constant 8 : index
    %c0_59 = arith.constant 0 : index
    %c0_60 = arith.constant 0 : index
    %94 = vector.load %arg2[%c8, %c0_59, %c0_60] : memref<9x8x4xf32, #tpu.memory_space<vmem>>, vector<1x8x4xf32>
    %95 = vector.shape_cast %94 : vector<1x8x4xf32> to vector<8x4xf32>
    %c0_61 = arith.constant 0 : index
    %c0_62 = arith.constant 0 : index
    %c145 = arith.constant 145 : index
    %96 = vector.load %arg5[%c0_61, %c0_62, %c145] : memref<1x4x512xf32, #tpu.memory_space<vmem>>, vector<1x4x256xf32>
    %97 = vector.shape_cast %96 : vector<1x4x256xf32> to vector<4x256xf32>
    %98 = vector.broadcast %33 : vector<1x256xf32> to vector<4x256xf32>
    %99 = arith.mulf %97, %98 : vector<4x256xf32>
    %cst_63 = arith.constant dense<0.000000e+00> : vector<8x256xf32>
    %100 = tpu.matmul %95, %99, %cst_63 {dimension_numbers = #tpu.dot_dimension_numbers<[1], [0], [0], [1], [0, 0, 1, 1], [], []>} : vector<8x4xf32>, vector<4x256xf32>, vector<8x256xf32> -> vector<8x256xf32>
    %101 = arith.addf %93, %100 : vector<8x256xf32>
    %102 = vector.broadcast %34 : vector<8x1xf32> to vector<8x256xf32>
    %103 = arith.addf %101, %102 : vector<8x256xf32>
    %cst_64 = arith.constant 0.000000e+00 : f32
    %104 = vector.broadcast %cst_64 : f32 to vector<8x256xf32>
    %105 = arith.maximumf %103, %104 : vector<8x256xf32>
    %c0_65 = arith.constant 0 : index
    %c0_66 = arith.constant 0 : index
    %c0_67 = arith.constant 0 : index
    %106 = vector.load %arg4[%c0_65, %c0_66, %c0_67] : memref<1x8x256xf32, #tpu.memory_space<vmem>>, vector<1x8x256xf32>
    %107 = vector.shape_cast %106 : vector<1x8x256xf32> to vector<8x256xf32>
    %108 = vector.shape_cast %105 : vector<8x256xf32> to vector<1x8x256xf32>
    tpu.vector_store %arg4[%c0_65, %c0_66, %c0_67], %108 {strides = array<i32>} : memref<1x8x256xf32, #tpu.memory_space<vmem>>, vector<1x8x256xf32>,
    return
  }
  func.func @transform_0(%arg0: i32) -> (i32, i32, i32) {
    %c0_i32 = arith.constant 0 : i32
    %c0_i32_0 = arith.constant 0 : i32
    %c0_i32_1 = arith.constant 0 : i32
    return %arg0, %c0_i32, %c0_i32_0 : i32, i32, i32
  }
  func.func @transform_1(%arg0: i32) -> (i32, i32, i32) {
    %c0_i32 = arith.constant 0 : i32
    %c0_i32_0 = arith.constant 0 : i32
    %c0_i32_1 = arith.constant 0 : i32
    %c0_i32_2 = arith.constant 0 : i32
    return %c0_i32, %c0_i32_0, %c0_i32_1 : i32, i32, i32
  }
  func.func @transform_2(%arg0: i32) -> (i32, i32) {
    %c0_i32 = arith.constant 0 : i32
    %c0_i32_0 = arith.constant 0 : i32
    %c0_i32_1 = arith.constant 0 : i32
    return %c0_i32, %c0_i32_0 : i32, i32
  }
  func.func @transform_3(%arg0: i32) -> (i32, i32, i32) {
    %c0_i32 = arith.constant 0 : i32
    %c0_i32_0 = arith.constant 0 : i32
    %c0_i32_1 = arith.constant 0 : i32
    return %arg0, %c0_i32, %c0_i32_0 : i32, i32, i32
  }
}

</mosaic_0001>

<llo_original>
// kernel: tpu_custom_call.1
$region0: #{tpu_custom_call.1}
  #allocation0 [shape = 'u32[]', space=smem, size = 0x4, offset = 0x4, fixed_abs, tag = 'smem constant byte address 0x4 - core index']
  #allocation1 [shape = 'u32[72,128]{1,0:T(1,128)}', space=vmem, size = 0x9000, scoped, tag = 'internal scratch']
  #allocation2 [shape = 'f32[1,4,512]{2,1,0:T(4,128)}', space=vmem, size = 0x2000, scoped, tag = 'scratch operand']
  %s0 = inlined_call_operand.vmem [shape: f32[2,4,256], index: 0, kind: input, shape index: {}]
  %s1 = inlined_call_operand.vmem [shape: f32[9,8,4], index: 1, kind: input, shape index: {}]
  %s2 = inlined_call_operand.vmem [shape: f32[8,1], index: 2, kind: input, shape index: {}]
  %s3 = inlined_call_operand.hbm [shape: f32[2,8,256], index: 3, kind: output, shape index: {}]
  %s4 = sld [smem:[#allocation0]]
  $region45: #{tpu_custom_call.1} parent=0
    _
  %s6 = ssub.s32 1, %s4
  %s7 = scalar_select 0, %s6, %s4
  $region1: #{tpu_custom_call.1} parent=0
    #allocation3 [shape = 'u8[16384]{0}', space=vmem, size = 0x4000, scoped, tag = 'output window, operand 0']
    #allocation4 [shape = 's32[2]{0}', space=sflag, size = 0x8, scoped, tag = 'scoped memory for tpu_custom_call.1']
    %8 = vsyncpa [#allocation4], 0
    %s9 = scalar_lea.sflag [#allocation4], 1
    %10 = vsyncpa %s9, 0
    loop: start=0, step=1, limit=4
    $region2: #{tpu_custom_call.1} parent=1 // loop_pre_header
      _
    $region3: #{tpu_custom_call.1} parent=1 // loop_header
      %s12 = sphi 0, %s16
      %p13 = scmp.ge.s32.totalorder %s12, 4
      %s22 = sphi 0, %s24
      %s25 = sphi 0, %s22
      %s26 = sphi 0, %s25
      %s42 = sphi 0, %s26
      %s46 = sphi 0, %s46
      %s48 = sphi 0, %s46
      %s49 = sphi 0, %s48
      %s63 = sphi 0, %s49
      %s67 = sphi 0, %s67
      %s69 = sphi 0, %s67
      %s70 = sphi 0, %s69
      %s84 = sphi 0, %s70
      %s90 = sphi 0, %s92
      %s93 = sphi 0, %s90
      %s94 = sphi 0, %s93
      %s110 = sphi 0, %s94
    $region4: #{tpu_custom_call.1} parent=1 // loop_header_branch
      %15 = sbr.rel (%p13) target = $region8
    $region5: #{tpu_custom_call.1} parent=1 // loop_body
      %s17 = ssub.s32 %s12, 1
      %s18 = ssub.s32 %s12, 2
      %s19 = sadd.s32 %s12, 1
      %s20 = ssub.s32 %s12, %s19
      %p21 = scmp.eq.s32.totalorder %s20, 0
      %s23 = sadd.s32 %s22, 1
      %s24 = scalar_select %p21, %s22, %s23
      %p27 = pneg %p21
      %p28 = scmp.eq.s32.totalorder %s12, 1
      %p29 = por %p27, %p28
      %p30 = scmp.ne.s32.totalorder %s22, %s25
      %p31 = scmp.eq.s32.totalorder %s12, 0
      %p32 = por %p30, %p31
      %p33 = scmp.ne.s32.totalorder %s22, %s25
      %p34 = scmp.eq.s32.totalorder %s17, 1
      %p35 = por %p33, %p34
      %p36 = scmp.ne.s32.totalorder %s25, %s26
      %p37 = scmp.eq.s32.totalorder %s17, 0
      %p38 = por %p36, %p37
      %p39 = scmp.ne.s32.totalorder %s25, %s26
      %p40 = scmp.eq.s32.totalorder %s18, 1
      %p41 = por %p39, %p40
      %p43 = scmp.ne.s32.totalorder %s26, %s42
      %p44 = scmp.eq.s32.totalorder %s18, 0
      %p45 = por %p43, %p44
      %s47 = sadd.s32 %s46, 1
      %p50 = scmp.eq.s32.totalorder %s12, 1
      %p51 = scmp.ne.s32.totalorder %s46, %s48
      %p52 = scmp.eq.s32.totalorder %s12, 0
      %p53 = por %p51, %p52
      %p54 = scmp.ne.s32.totalorder %s46, %s48
      %p55 = scmp.eq.s32.totalorder %s17, 1
      %p56 = por %p54, %p55
      %p57 = scmp.ne.s32.totalorder %s48, %s49
      %p58 = scmp.eq.s32.totalorder %s17, 0
      %p59 = por %p57, %p58
      %p60 = scmp.ne.s32.totalorder %s48, %s49
      %p61 = scmp.eq.s32.totalorder %s18, 1
      %p62 = por %p60, %p61
      %p64 = scmp.ne.s32.totalorder %s49, %s63
      %p65 = scmp.eq.s32.totalorder %s18, 0
      %p66 = por %p64, %p65
      %s68 = sadd.s32 %s67, 1
      %p71 = scmp.eq.s32.totalorder %s12, 1
      %p72 = scmp.ne.s32.totalorder %s67, %s69
      %p73 = scmp.eq.s32.totalorder %s12, 0
      %p74 = por %p72, %p73
      %p75 = scmp.ne.s32.totalorder %s67, %s69
      %p76 = scmp.eq.s32.totalorder %s17, 1
      %p77 = por %p75, %p76
      %p78 = scmp.ne.s32.totalorder %s69, %s70
      %p79 = scmp.eq.s32.totalorder %s17, 0
      %p80 = por %p78, %p79
      %p81 = scmp.ne.s32.totalorder %s69, %s70
      %p82 = scmp.eq.s32.totalorder %s18, 1
      %p83 = por %p81, %p82
      %p85 = scmp.ne.s32.totalorder %s70, %s84
      %p86 = scmp.eq.s32.totalorder %s18, 0
      %p87 = por %p85, %p86
      %s88 = ssub.s32 %s12, %s19
      %p89 = scmp.eq.s32.totalorder %s88, 0
      %s91 = sadd.s32 %s90, 1
      %s92 = scalar_select %p89, %s90, %s91
      %p95 = pneg %p89
      %p96 = scmp.eq.s32.totalorder %s12, 1
      %p97 = por %p95, %p96
      %p98 = scmp.ne.s32.totalorder %s90, %s93
      %p99 = scmp.eq.s32.totalorder %s12, 0
      %p100 = por %p98, %p99
      %p101 = scmp.ne.s32.totalorder %s90, %s93
      %p102 = scmp.eq.s32.totalorder %s17, 1
      %p103 = por %p101, %p102
      %p104 = scmp.ne.s32.totalorder %s93, %s94
      %p105 = scmp.eq.s32.totalorder %s17, 0
      %p106 = por %p104, %p105
      %p107 = scmp.ne.s32.totalorder %s93, %s94
      %p108 = scmp.eq.s32.totalorder %s18, 1
      %p109 = por %p107, %p108
      %p111 = scmp.ne.s32.totalorder %s94, %s110
      %p112 = scmp.eq.s32.totalorder %s18, 0
      %p113 = por %p111, %p112
      %p114 = scmp.le.s32.totalorder 1, %s12
      %p115 = scmp.lt.s32.totalorder %s12, 3
      %p116 = pnand %p114, %p115
      %p117 = pneg %p116
      // Predicated region
      $region9: #{tpu_custom_call.1} parent=5 // pred_check
        _
      $region10: #{tpu_custom_call.1} parent=5 // pred_check_branch
        %119 = sbr.rel (%p116) target = $region12
      $region11: #{tpu_custom_call.1} parent=5 // pred_region
        %s120 = ssub.s32 %s12, 1
        // Predicated region
        $region13: #{tpu_custom_call.1} parent=11 // pred_check
          %p121 = pneg %p59
        $region14: #{tpu_custom_call.1} parent=11 // pred_check_branch
          %123 = sbr.rel (%p121) target = $region16
        $region15: #{tpu_custom_call.1} parent=11 // pred_region
          _
        $region16: #{tpu_custom_call.1} parent=11 // pred_fallthru
          _
        // Predicated region
        $region17: #{tpu_custom_call.1} parent=11 // pred_check
          %p124 = pneg %p80
        $region18: #{tpu_custom_call.1} parent=11 // pred_check_branch
          %126 = sbr.rel (%p124) target = $region20
        $region19: #{tpu_custom_call.1} parent=11 // pred_region
          _
        $region20: #{tpu_custom_call.1} parent=11 // pred_fallthru
          _
      $region12: #{tpu_custom_call.1} parent=5 // pred_fallthru
        _
      %p127 = scmp.lt.s32.totalorder %s12, 2
      // Predicated region
      $region21: #{tpu_custom_call.1} parent=5 // pred_check
        %p128 = pneg %p127
      $region22: #{tpu_custom_call.1} parent=5 // pred_check_branch
        %130 = sbr.rel (%p128) target = $region24
      $region23: #{tpu_custom_call.1} parent=5 // pred_region
        // Predicated region
        $region25: #{tpu_custom_call.1} parent=23 // pred_check
          %p131 = pneg %p32
        $region26: #{tpu_custom_call.1} parent=23 // pred_check_branch
          %133 = sbr.rel (%p131) target = $region28
        $region27: #{tpu_custom_call.1} parent=23 // pred_region
          %p134 = scmp.lt.s32.totalorder %s12, 1
          %s135 = scalar_select %p134, %s12, 1
          %s136 = smul.addr %s135, 2
          %s137 = smul.addr %s136, 4
          %s138 = scalar_lea.vmem %s0, %s137
        $region28: #{tpu_custom_call.1} parent=23 // pred_fallthru
          _
      $region24: #{tpu_custom_call.1} parent=5 // pred_fallthru
        _
      %p139 = scmp.le.s32.totalorder 1, %s12
      %p140 = scmp.lt.s32.totalorder %s12, 3
      %p141 = pnand %p139, %p140
      %p142 = pneg %p141
      // Predicated region
      $region29: #{tpu_custom_call.1} parent=5 // pred_check
        _
      $region30: #{tpu_custom_call.1} parent=5 // pred_check_branch
        %144 = sbr.rel (%p141) target = $region32
      $region31: #{tpu_custom_call.1} parent=5 // pred_region
        %s145 = ssub.s32 %s12, 1
        %p146 = scmp.lt.s32.totalorder %s17, 1
        %s147 = scalar_select %p146, %s17, 1
        %s148 = smul.addr %s147, 2
        %s149 = smul.addr %s148, 4
        %s150 = scalar_lea.vmem %s0, %s149
        %p151 = pneg %p38
        %p152 = pneg %p35
        %p153 = pneg %p59
        %p154 = pneg %p56
        %p155 = pneg %p80
        %p156 = pneg %p77
        %p157 = pneg %p106
        %p158 = pneg %p103
        %s159 = sand.u32 %s93, 1
        %s160 = scalar_lea.sflag [#allocation4], %s159
        %s161 = sand.u32 %s93, 1
        %s162 = smul.addr %s161, 16
        %s163 = scalar_lea.vmem [#allocation3], %s162
        %p164 = scmp.lt.s32.totalorder %s17, 1
        %s165 = scalar_select %p164, %s17, 1
        %s166 = smul.addr %s165, 2
        %s167 = smul.addr %s166, 4
        %s168 = scalar_lea.vmem %s0, %s167
        %v169 = vld [vmem:[%s168] sm:$0xff]
        %170 = vst [vmem:[#allocation2] sm:$0xf] 0.0
        %171 = vst [vmem:[#allocation2 + $0xc] sm:$0xf] 0.0
        %172 = vst [vmem:[#allocation2 + $0x4] sm:$0xff] %v169
        %v173 = vlaneseq
        %v174 = vand.u32 %v173, 127
        %v175 = vadd.s32 %v174, 128
        %vm176 = vcmp.lt.s32.totalorder %v174, 0
        %v177 = vsub.s32 0, %v174
        %v178 = vsel %vm176, %v177, %v174
        %v179 = vshrl.u32 %v178, 4
        %v180 = vand.u32 %v178, 15
        %v181 = vsub.s32 0, %v180
        %v182 = vsel %vm176, %v181, %v180
        %vm183 = vcmp.lt.s32.totalorder %v175, 0
        %v184 = vsub.s32 0, %v175
        %v185 = vsel %vm183, %v184, %v175
        %v186 = vshrl.u32 %v185, 4
        %v187 = vand.u32 %v185, 15
        %v188 = vsub.s32 0, %v187
        %v189 = vsel %vm183, %v188, %v187
        %vm190 = vcmp.ne.s32.totalorder %v182, 0
        %vm191 = vcmp.ne.s32.totalorder %v189, 0
        %vm192 = vcmp.lt.s32.totalorder %v182, 0
        %vm193 = vcmp.lt.s32.totalorder %v189, 0
        %vm194 = vmand %vm192, %vm190
        %vm195 = vmand %vm193, %vm191
        %v196 = vadd.s32 %v182, 16
        %v197 = vadd.s32 %v189, 16
        %v198 = vsel %vm194, %v196, %v182
        %v199 = vsel %vm195, %v197, %v189
        %vm200 = vcmp.ne.s32.totalorder %v198, 0
        %vm201 = vcmp.ne.s32.totalorder %v199, 0
        %v202 = vsel %vm200, 1, 0
        %v203 = vsel %vm201, 1, 0
        %v204 = vcvt.s32.f32 %v202
        %v205 = vcvt.s32.f32 %v203
        %vm206 = vcmp.ne.s32.totalorder %v198, 15
        %vm207 = vcmp.ne.s32.totalorder %v199, 15
        %v208 = vsel %vm206, 1, 0
        %v209 = vsel %vm207, 1, 0
        %v210 = vcvt.s32.f32 %v208
        %v211 = vcvt.s32.f32 %v209
        %v212 = vld [vmem:[%s2] sm:$0xff]
        %v213 = vld [vmem:[%s1] sm:$0xff]
        %v214 = vld [vmem:[#allocation2] sm:$0xff]
        %v215 = vld [vmem:[#allocation2 + $0x8] sm:$0xf]
        %v218 = vrot.slane %v205, 4
        %vm219 = vcmask 1043456
        %v220 = vsel %vm219, %v204, %v218
        %221 = vrot.lane.b32.xlu0 %v220, 111
        %v222 = vpop.permute.xlu0 %221
        %v223 = vrot.slane %v222, 4
        %vm224 = vcmask 908288
        %v225 = vsel %vm224, %v223, %v222
        %v228 = vmul.f32 %v214, %v225
        %v229 = vmul.f32 %v215, %v223
        %s230 = scalar_lea.vmem %s1, 8
        %v231 = vld [vmem:[%s230] sm:$0xff]
        %234 = vst [vmem:[#allocation1] ss:$2 sm:$0xff] %v214
        %s235 = scalar_lea.vmem [#allocation1], 16
        %236 = vst [vmem:[%s235] ss:$2 sm:$0xff] %v215
        %v237 = vld.sshfl [vmem:[#allocation1] sm:$0xff pattern:$0x75316420]
        %v238 = vld.sshfl [vmem:[#allocation1 + $0x8] sm:$0xff pattern:$0x75316420]
        %v239 = vld.sshfl [vmem:[#allocation1 + $0x10] sm:$0xff pattern:$0x75316420]
        %240 = vrot.lane.b32.xlu0 %v237, 16
        %v241 = vpop.permute.xlu0 %240
        %242 = vrot.lane.b32.xlu0 %v238, 16
        %v243 = vpop.permute.xlu0 %242
        %244 = vrot.lane.b32.xlu0 %v239, 16
        %v245 = vpop.permute.xlu0 %244
        %vm246 = vcmask 130048
        %v247 = vsel %vm246, %v241, %v243
        %v248 = vsel %vm246, %v243, %v245
        %vm249 = vcmask 31744
        %v251 = vsel %vm249, %v231, 0
        %v253 = vsel %vm219, %v247, 0
        %v255 = vsel %vm219, %v248, 0
        %257 = vmatpush.msra.mxu0 0.0
        %258 = vmatpush.msra.mxu0 0.0
        %259 = vmatpush.msra.mxu0 0.0
        %260 = vmatpush.msra.mxu0 0.0
        %261 = vmatpush.msra.mxu0 0.0
        %262 = vmatpush.msra.mxu0 0.0
        %263 = vmatpush.msra.mxu0 0.0
        %264 = vmatpush.msra.mxu0 0.0
        %265 = vmatpush.msra.mxu0 0.0
        %266 = vmatpush.msra.mxu0 0.0
        %267 = vmatpush.msra.mxu0 0.0
        %268 = vmatpush.msra.mxu0 0.0
        %269 = vmatpush.msra.mxu0 0.0
        %270 = vmatpush.msra.mxu0 0.0
        %271 = vmatpush.msra.mxu0 0.0
        %272 = vmatpush.msra.mxu0 %v253
        %273 = vmatmul.f32.gmra.mxu0 %v251
        %v274 = vpop.f32.mrf.mxu0
        %v275 = vadd.f32 0.0, %v274
        %276 = vdwg.mxu0
        %277 = vmatpush.msra.mxu0 0.0
        %278 = vmatpush.msra.mxu0 0.0
        %279 = vmatpush.msra.mxu0 0.0
        %280 = vmatpush.msra.mxu0 0.0
        %281 = vmatpush.msra.mxu0 0.0
        %282 = vmatpush.msra.mxu0 0.0
        %283 = vmatpush.msra.mxu0 0.0
        %284 = vmatpush.msra.mxu0 0.0
        %285 = vmatpush.msra.mxu0 0.0
        %286 = vmatpush.msra.mxu0 0.0
        %287 = vmatpush.msra.mxu0 0.0
        %288 = vmatpush.msra.mxu0 0.0
        %289 = vmatpush.msra.mxu0 0.0
        %290 = vmatpush.msra.mxu0 0.0
        %291 = vmatpush.msra.mxu0 0.0
        %292 = vmatpush.msra.mxu0 %v255
        %293 = vmatmul.f32.gmra.mxu0 %v251
        %v294 = vpop.f32.mrf.mxu0
        %v295 = vadd.f32 0.0, %v294
        %296 = vdwg.mxu0
        %299 = vst [vmem:[#allocation1] ss:$2 sm:$0xff] %v228
        %s300 = scalar_lea.vmem [#allocation1], 16
        %301 = vst [vmem:[%s300] ss:$2 sm:$0xff] %v229
        %v302 = vld.sshfl [vmem:[#allocation1] sm:$0xff pattern:$0x75316420]
        %v303 = vld.sshfl [vmem:[#allocation1 + $0x8] sm:$0xff pattern:$0x75316420]
        %v304 = vld.sshfl [vmem:[#allocation1 + $0x10] sm:$0xff pattern:$0x75316420]
        %305 = vrot.lane.b32.xlu0 %v302, 17
        %v306 = vpop.permute.xlu0 %305
        %307 = vrot.lane.b32.xlu0 %v303, 17
        %v308 = vpop.permute.xlu0 %307
        %309 = vrot.lane.b32.xlu0 %v304, 17
        %v310 = vpop.permute.xlu0 %309
        %vm311 = vcmask 138240
        %v312 = vsel %vm311, %v306, %v308
        %v313 = vsel %vm311, %v308, %v310
        %v315 = vsel %vm249, %v213, 0
        %v317 = vsel %vm219, %v312, 0
        %v319 = vsel %vm219, %v313, 0
        %321 = vmatpush.msra.mxu0 0.0
        %322 = vmatpush.msra.mxu0 0.0
        %323 = vmatpush.msra.mxu0 0.0
        %324 = vmatpush.msra.mxu0 0.0
        %325 = vmatpush.msra.mxu0 0.0
        %326 = vmatpush.msra.mxu0 0.0
        %327 = vmatpush.msra.mxu0 0.0
        %328 = vmatpush.msra.mxu0 0.0
        %329 = vmatpush.msra.mxu0 0.0
        %330 = vmatpush.msra.mxu0 0.0
        %331 = vmatpush.msra.mxu0 0.0
        %332 = vmatpush.msra.mxu0 0.0
        %333 = vmatpush.msra.mxu0 0.0
        %334 = vmatpush.msra.mxu0 0.0
        %335 = vmatpush.msra.mxu0 0.0
        %336 = vmatpush.msra.mxu0 %v317
        %337 = vmatmul.f32.gmra.mxu0 %v315
        %v338 = vpop.f32.mrf.mxu0
        %v339 = vadd.f32 %v275, %v338
        %340 = vdwg.mxu0
        %341 = vmatpush.msra.mxu0 0.0
        %342 = vmatpush.msra.mxu0 0.0
        %343 = vmatpush.msra.mxu0 0.0
        %344 = vmatpush.msra.mxu0 0.0
        %345 = vmatpush.msra.mxu0 0.0
        %346 = vmatpush.msra.mxu0 0.0
        %347 = vmatpush.msra.mxu0 0.0
        %348 = vmatpush.msra.mxu0 0.0
        %349 = vmatpush.msra.mxu0 0.0
        %350 = vmatpush.msra.mxu0 0.0
        %351 = vmatpush.msra.mxu0 0.0
        %352 = vmatpush.msra.mxu0 0.0
        %353 = vmatpush.msra.mxu0 0.0
        %354 = vmatpush.msra.mxu0 0.0
        %355 = vmatpush.msra.mxu0 0.0
        %356 = vmatpush.msra.mxu0 %v319
        %357 = vmatmul.f32.gmra.mxu0 %v315
        %v358 = vpop.f32.mrf.mxu0
        %v359 = vadd.f32 %v295, %v358
        %360 = vdwg.mxu0
        %s361 = scalar_lea.vmem %s1, 16
        %v362 = vld [vmem:[%s361] sm:$0xff]
        %v363 = vld [vmem:[#allocation2] sm:$0xff]
        %v364 = vld [vmem:[#allocation2 + $0x8] sm:$0xf]
        %v367 = vrot.slane %v211, 4
        %v368 = vsel %vm219, %v210, %v367
        %369 = vrot.lane.b32.xlu0 %v368, 113
        %v370 = vpop.permute.xlu0 %369
        %v371 = vrot.slane %v370, 4
        %vm372 = vcmask 924672
        %v373 = vsel %vm372, %v371, %v370
        %v376 = vmul.f32 %v363, %v373
        %v377 = vmul.f32 %v364, %v371
        %380 = vst [vmem:[#allocation1] ss:$2 sm:$0xff] %v376
        %s381 = scalar_lea.vmem [#allocation1], 16
        %382 = vst [vmem:[%s381] ss:$2 sm:$0xff] %v377
        %v383 = vld.sshfl [vmem:[#allocation1] sm:$0xff pattern:$0x75316420]
        %v384 = vld.sshfl [vmem:[#allocation1 + $0x8] sm:$0xff pattern:$0x75316420]
        %v385 = vld.sshfl [vmem:[#allocation1 + $0x10] sm:$0xff pattern:$0x75316420]
        %386 = vrot.lane.b32.xlu0 %v383, 15
        %v387 = vpop.permute.xlu0 %386
        %388 = vrot.lane.b32.xlu0 %v384, 15
        %v389 = vpop.permute.xlu0 %388
        %390 = vrot.lane.b32.xlu0 %v385, 15
        %v391 = vpop.permute.xlu0 %390
        %vm392 = vcmask 121856
        %v393 = vsel %vm392, %v387, %v389
        %v394 = vsel %vm392, %v389, %v391
        %v396 = vsel %vm249, %v362, 0
        %v398 = vsel %vm219, %v393, 0
        %v400 = vsel %vm219, %v394, 0
        %402 = vmatpush.msra.mxu0 0.0
        %403 = vmatpush.msra.mxu0 0.0
        %404 = vmatpush.msra.mxu0 0.0
        %405 = vmatpush.msra.mxu0 0.0
        %406 = vmatpush.msra.mxu0 0.0
        %407 = vmatpush.msra.mxu0 0.0
        %408 = vmatpush.msra.mxu0 0.0
        %409 = vmatpush.msra.mxu0 0.0
        %410 = vmatpush.msra.mxu0 0.0
        %411 = vmatpush.msra.mxu0 0.0
        %412 = vmatpush.msra.mxu0 0.0
        %413 = vmatpush.msra.mxu0 0.0
        %414 = vmatpush.msra.mxu0 0.0
        %415 = vmatpush.msra.mxu0 0.0
        %416 = vmatpush.msra.mxu0 0.0
        %417 = vmatpush.msra.mxu0 %v398
        %418 = vmatmul.f32.gmra.mxu0 %v396
        %v419 = vpop.f32.mrf.mxu0
        %v420 = vadd.f32 0.0, %v419
        %421 = vdwg.mxu0
        %422 = vmatpush.msra.mxu0 0.0
        %423 = vmatpush.msra.mxu0 0.0
        %424 = vmatpush.msra.mxu0 0.0
        %425 = vmatpush.msra.mxu0 0.0
        %426 = vmatpush.msra.mxu0 0.0
        %427 = vmatpush.msra.mxu0 0.0
        %428 = vmatpush.msra.mxu0 0.0
        %429 = vmatpush.msra.mxu0 0.0
        %430 = vmatpush.msra.mxu0 0.0
        %431 = vmatpush.msra.mxu0 0.0
        %432 = vmatpush.msra.mxu0 0.0
        %433 = vmatpush.msra.mxu0 0.0
        %434 = vmatpush.msra.mxu0 0.0
        %435 = vmatpush.msra.mxu0 0.0
        %436 = vmatpush.msra.mxu0 0.0
        %437 = vmatpush.msra.mxu0 %v400
        %438 = vmatmul.f32.gmra.mxu0 %v396
        %v439 = vpop.f32.mrf.mxu0
        %v440 = vadd.f32 0.0, %v439
        %441 = vdwg.mxu0
        %v442 = vadd.f32 %v339, %v420
        %v443 = vadd.f32 %v359, %v440
        %s444 = scalar_lea.vmem %s1, 24
        %v445 = vld [vmem:[%s444] sm:$0xff]
        %v446 = vld [vmem:[#allocation2] sm:$0xff]
        %v447 = vld [vmem:[#allocation2 + $0x8] sm:$0xf]
        %448 = vrot.lane.b32.xlu0 %v220, 127
        %v449 = vpop.permute.xlu0 %448
        %v450 = vrot.slane %v449, 4
        %vm451 = vcmask 1039360
        %v452 = vsel %vm451, %v450, %v449
        %v455 = vmul.f32 %v446, %v452
        %v456 = vmul.f32 %v447, %v450
        %459 = vst [vmem:[#allocation1] ss:$2 sm:$0xff] %v455
        %s460 = scalar_lea.vmem [#allocation1], 16
        %461 = vst [vmem:[%s460] ss:$2 sm:$0xff] %v456
        %v462 = vld.sshfl [vmem:[#allocation1] sm:$0xff pattern:$0x75316420]
        %v463 = vld.sshfl [vmem:[#allocation1 + $0x8] sm:$0xff pattern:$0x75316420]
        %v464 = vld.sshfl [vmem:[#allocation1 + $0x10] sm:$0xff pattern:$0x75316420]
        %465 = vrot.lane.b32.xlu0 %v462, 1
        %v466 = vpop.permute.xlu0 %465
        %467 = vrot.lane.b32.xlu0 %v463, 1
        %v468 = vpop.permute.xlu0 %467
        %469 = vrot.lane.b32.xlu0 %v464, 1
        %v470 = vpop.permute.xlu0 %469
        %vm471 = vcmask 7168
        %v472 = vsel %vm471, %v466, %v468
        %v473 = vsel %vm471, %v468, %v470
        %v475 = vsel %vm249, %v445, 0
        %v477 = vsel %vm219, %v472, 0
        %v479 = vsel %vm219, %v473, 0
        %481 = vmatpush.msra.mxu0 0.0
        %482 = vmatpush.msra.mxu0 0.0
        %483 = vmatpush.msra.mxu0 0.0
        %484 = vmatpush.msra.mxu0 0.0
        %485 = vmatpush.msra.mxu0 0.0
        %486 = vmatpush.msra.mxu0 0.0
        %487 = vmatpush.msra.mxu0 0.0
        %488 = vmatpush.msra.mxu0 0.0
        %489 = vmatpush.msra.mxu0 0.0
        %490 = vmatpush.msra.mxu0 0.0
        %491 = vmatpush.msra.mxu0 0.0
        %492 = vmatpush.msra.mxu0 0.0
        %493 = vmatpush.msra.mxu0 0.0
        %494 = vmatpush.msra.mxu0 0.0
        %495 = vmatpush.msra.mxu0 0.0
        %496 = vmatpush.msra.mxu0 %v477
        %497 = vmatmul.f32.gmra.mxu0 %v475
        %v498 = vpop.f32.mrf.mxu0
        %v499 = vadd.f32 0.0, %v498
        %500 = vdwg.mxu0
        %501 = vmatpush.msra.mxu0 0.0
        %502 = vmatpush.msra.mxu0 0.0
        %503 = vmatpush.msra.mxu0 0.0
        %504 = vmatpush.msra.mxu0 0.0
        %505 = vmatpush.msra.mxu0 0.0
        %506 = vmatpush.msra.mxu0 0.0
        %507 = vmatpush.msra.mxu0 0.0
        %508 = vmatpush.msra.mxu0 0.0
        %509 = vmatpush.msra.mxu0 0.0
        %510 = vmatpush.msra.mxu0 0.0
        %511 = vmatpush.msra.mxu0 0.0
        %512 = vmatpush.msra.mxu0 0.0
        %513 = vmatpush.msra.mxu0 0.0
        %514 = vmatpush.msra.mxu0 0.0
        %515 = vmatpush.msra.mxu0 0.0
        %516 = vmatpush.msra.mxu0 %v479
        %517 = vmatmul.f32.gmra.mxu0 %v475
        %v518 = vpop.f32.mrf.mxu0
        %v519 = vadd.f32 0.0, %v518
        %520 = vdwg.mxu0
        %v521 = vadd.f32 %v442, %v499
        %v522 = vadd.f32 %v443, %v519
        %s523 = scalar_lea.vmem %s1, 32
        %v524 = vld [vmem:[%s523] sm:$0xff]
        %v525 = vld [vmem:[#allocation2 + $0x4] sm:$0xff]
        %527 = vst [vmem:[#allocation1] ss:$2 sm:$0xff] %v525
        %v528 = vld.sshfl [vmem:[#allocation1] sm:$0xff pattern:$0x75316420]
        %v529 = vld.sshfl [vmem:[#allocation1 + $0x8] sm:$0xff pattern:$0x75316420]
        %v531 = vsel %vm249, %v524, 0
        %v533 = vsel %vm219, %v528, 0
        %v535 = vsel %vm219, %v529, 0
        %537 = vmatpush.msra.mxu0 0.0
        %538 = vmatpush.msra.mxu0 0.0
        %539 = vmatpush.msra.mxu0 0.0
        %540 = vmatpush.msra.mxu0 0.0
        %541 = vmatpush.msra.mxu0 0.0
        %542 = vmatpush.msra.mxu0 0.0
        %543 = vmatpush.msra.mxu0 0.0
        %544 = vmatpush.msra.mxu0 0.0
        %545 = vmatpush.msra.mxu0 0.0
        %546 = vmatpush.msra.mxu0 0.0
        %547 = vmatpush.msra.mxu0 0.0
        %548 = vmatpush.msra.mxu0 0.0
        %549 = vmatpush.msra.mxu0 0.0
        %550 = vmatpush.msra.mxu0 0.0
        %551 = vmatpush.msra.mxu0 0.0
        %552 = vmatpush.msra.mxu0 %v533
        %553 = vmatmul.f32.gmra.mxu0 %v531
        %v554 = vpop.f32.mrf.mxu0
        %v555 = vadd.f32 0.0, %v554
        %556 = vdwg.mxu0
        %557 = vmatpush.msra.mxu0 0.0
        %558 = vmatpush.msra.mxu0 0.0
        %559 = vmatpush.msra.mxu0 0.0
        %560 = vmatpush.msra.mxu0 0.0
        %561 = vmatpush.msra.mxu0 0.0
        %562 = vmatpush.msra.mxu0 0.0
        %563 = vmatpush.msra.mxu0 0.0
        %564 = vmatpush.msra.mxu0 0.0
        %565 = vmatpush.msra.mxu0 0.0
        %566 = vmatpush.msra.mxu0 0.0
        %567 = vmatpush.msra.mxu0 0.0
        %568 = vmatpush.msra.mxu0 0.0
        %569 = vmatpush.msra.mxu0 0.0
        %570 = vmatpush.msra.mxu0 0.0
        %571 = vmatpush.msra.mxu0 0.0
        %572 = vmatpush.msra.mxu0 %v535
        %573 = vmatmul.f32.gmra.mxu0 %v531
        %v574 = vpop.f32.mrf.mxu0
        %v575 = vadd.f32 0.0, %v574
        %576 = vdwg.mxu0
        %v577 = vadd.f32 %v521, %v555
        %v578 = vadd.f32 %v522, %v575
        %s579 = scalar_lea.vmem %s1, 40
        %v580 = vld [vmem:[%s579] sm:$0xff]
        %v581 = vld [vmem:[#allocation2 + $0x4] sm:$0xff]
        %v582 = vld [vmem:[#allocation2 + $0xc] sm:$0xf]
        %583 = vrot.lane.b32.xlu0 %v368, 1
        %v584 = vpop.permute.xlu0 %583
        %v585 = vrot.slane %v584, 4
        %v586 = vsel %vm471, %v585, %v584
        %v589 = vmul.f32 %v581, %v586
        %v590 = vmul.f32 %v582, %v585
        %593 = vst [vmem:[#allocation1] ss:$2 sm:$0xff] %v589
        %s594 = scalar_lea.vmem [#allocation1], 16
        %595 = vst [vmem:[%s594] ss:$2 sm:$0xff] %v590
        %v596 = vld.sshfl [vmem:[#allocation1] sm:$0xff pattern:$0x75316420]
        %v597 = vld.sshfl [vmem:[#allocation1 + $0x8] sm:$0xff pattern:$0x75316420]
        %v598 = vld.sshfl [vmem:[#allocation1 + $0x10] sm:$0xff pattern:$0x75316420]
        %599 = vrot.lane.b32.xlu0 %v596, 127
        %v600 = vpop.permute.xlu0 %599
        %601 = vrot.lane.b32.xlu0 %v597, 127
        %v602 = vpop.permute.xlu0 %601
        %603 = vrot.lane.b32.xlu0 %v598, 127
        %v604 = vpop.permute.xlu0 %603
        %v605 = vsel %vm451, %v600, %v602
        %v606 = vsel %vm451, %v602, %v604
        %v608 = vsel %vm249, %v580, 0
        %v610 = vsel %vm219, %v605, 0
        %v612 = vsel %vm219, %v606, 0
        %614 = vmatpush.msra.mxu0 0.0
        %615 = vmatpush.msra.mxu0 0.0
        %616 = vmatpush.msra.mxu0 0.0
        %617 = vmatpush.msra.mxu0 0.0
        %618 = vmatpush.msra.mxu0 0.0
        %619 = vmatpush.msra.mxu0 0.0
        %620 = vmatpush.msra.mxu0 0.0
        %621 = vmatpush.msra.mxu0 0.0
        %622 = vmatpush.msra.mxu0 0.0
        %623 = vmatpush.msra.mxu0 0.0
        %624 = vmatpush.msra.mxu0 0.0
        %625 = vmatpush.msra.mxu0 0.0
        %626 = vmatpush.msra.mxu0 0.0
        %627 = vmatpush.msra.mxu0 0.0
        %628 = vmatpush.msra.mxu0 0.0
        %629 = vmatpush.msra.mxu0 %v610
        %630 = vmatmul.f32.gmra.mxu0 %v608
        %v631 = vpop.f32.mrf.mxu0
        %v632 = vadd.f32 0.0, %v631
        %633 = vdwg.mxu0
        %634 = vmatpush.msra.mxu0 0.0
        %635 = vmatpush.msra.mxu0 0.0
        %636 = vmatpush.msra.mxu0 0.0
        %637 = vmatpush.msra.mxu0 0.0
        %638 = vmatpush.msra.mxu0 0.0
        %639 = vmatpush.msra.mxu0 0.0
        %640 = vmatpush.msra.mxu0 0.0
        %641 = vmatpush.msra.mxu0 0.0
        %642 = vmatpush.msra.mxu0 0.0
        %643 = vmatpush.msra.mxu0 0.0
        %644 = vmatpush.msra.mxu0 0.0
        %645 = vmatpush.msra.mxu0 0.0
        %646 = vmatpush.msra.mxu0 0.0
        %647 = vmatpush.msra.mxu0 0.0
        %648 = vmatpush.msra.mxu0 0.0
        %649 = vmatpush.msra.mxu0 %v612
        %650 = vmatmul.f32.gmra.mxu0 %v608
        %v651 = vpop.f32.mrf.mxu0
        %v652 = vadd.f32 0.0, %v651
        %653 = vdwg.mxu0
        %v654 = vadd.f32 %v577, %v632
        %v655 = vadd.f32 %v578, %v652
        %s656 = scalar_lea.vmem %s1, 48
        %v657 = vld [vmem:[%s656] sm:$0xff]
        %v658 = vld [vmem:[#allocation2 + $0x4] sm:$0xff]
        %v659 = vld [vmem:[#allocation2 + $0xc] sm:$0xf]
        %660 = vrot.lane.b32.xlu0 %v220, 15
        %v661 = vpop.permute.xlu0 %660
        %v662 = vrot.slane %v661, 4
        %v663 = vsel %vm392, %v662, %v661
        %v666 = vmul.f32 %v658, %v663
        %v667 = vmul.f32 %v659, %v662
        %670 = vst [vmem:[#allocation1] ss:$2 sm:$0xff] %v666
        %s671 = scalar_lea.vmem [#allocation1], 16
        %672 = vst [vmem:[%s671] ss:$2 sm:$0xff] %v667
        %v673 = vld.sshfl [vmem:[#allocation1] sm:$0xff pattern:$0x75316420]
        %v674 = vld.sshfl [vmem:[#allocation1 + $0x8] sm:$0xff pattern:$0x75316420]
        %v675 = vld.sshfl [vmem:[#allocation1 + $0x10] sm:$0xff pattern:$0x75316420]
        %676 = vrot.lane.b32.xlu0 %v673, 113
        %v677 = vpop.permute.xlu0 %676
        %678 = vrot.lane.b32.xlu0 %v674, 113
        %v679 = vpop.permute.xlu0 %678
        %680 = vrot.lane.b32.xlu0 %v675, 113
        %v681 = vpop.permute.xlu0 %680
        %v682 = vsel %vm372, %v677, %v679
        %v683 = vsel %vm372, %v679, %v681
        %v685 = vsel %vm249, %v657, 0
        %v687 = vsel %vm219, %v682, 0
        %v689 = vsel %vm219, %v683, 0
        %691 = vmatpush.msra.mxu0 0.0
        %692 = vmatpush.msra.mxu0 0.0
        %693 = vmatpush.msra.mxu0 0.0
        %694 = vmatpush.msra.mxu0 0.0
        %695 = vmatpush.msra.mxu0 0.0
        %696 = vmatpush.msra.mxu0 0.0
        %697 = vmatpush.msra.mxu0 0.0
        %698 = vmatpush.msra.mxu0 0.0
        %699 = vmatpush.msra.mxu0 0.0
        %700 = vmatpush.msra.mxu0 0.0
        %701 = vmatpush.msra.mxu0 0.0
        %702 = vmatpush.msra.mxu0 0.0
        %703 = vmatpush.msra.mxu0 0.0
        %704 = vmatpush.msra.mxu0 0.0
        %705 = vmatpush.msra.mxu0 0.0
        %706 = vmatpush.msra.mxu0 %v687
        %707 = vmatmul.f32.gmra.mxu0 %v685
        %v708 = vpop.f32.mrf.mxu0
        %v709 = vadd.f32 0.0, %v708
        %710 = vdwg.mxu0
        %711 = vmatpush.msra.mxu0 0.0
        %712 = vmatpush.msra.mxu0 0.0
        %713 = vmatpush.msra.mxu0 0.0
        %714 = vmatpush.msra.mxu0 0.0
        %715 = vmatpush.msra.mxu0 0.0
        %716 = vmatpush.msra.mxu0 0.0
        %717 = vmatpush.msra.mxu0 0.0
        %718 = vmatpush.msra.mxu0 0.0
        %719 = vmatpush.msra.mxu0 0.0
        %720 = vmatpush.msra.mxu0 0.0
        %721 = vmatpush.msra.mxu0 0.0
        %722 = vmatpush.msra.mxu0 0.0
        %723 = vmatpush.msra.mxu0 0.0
        %724 = vmatpush.msra.mxu0 0.0
        %725 = vmatpush.msra.mxu0 0.0
        %726 = vmatpush.msra.mxu0 %v689
        %727 = vmatmul.f32.gmra.mxu0 %v685
        %v728 = vpop.f32.mrf.mxu0
        %v729 = vadd.f32 0.0, %v728
        %730 = vdwg.mxu0
        %v731 = vadd.f32 %v654, %v709
        %v732 = vadd.f32 %v655, %v729
        %s733 = scalar_lea.vmem %s1, 56
        %v734 = vld [vmem:[%s733] sm:$0xff]
        %v735 = vld [vmem:[#allocation2 + $0x4] sm:$0xff]
        %v736 = vld [vmem:[#allocation2 + $0xc] sm:$0xf]
        %739 = vst [vmem:[#allocation1] ss:$2 sm:$0xff] %v735
        %s740 = scalar_lea.vmem [#allocation1], 16
        %741 = vst [vmem:[%s740] ss:$2 sm:$0xff] %v736
        %v742 = vld.sshfl [vmem:[#allocation1] sm:$0xff pattern:$0x75316420]
        %v743 = vld.sshfl [vmem:[#allocation1 + $0x8] sm:$0xff pattern:$0x75316420]
        %v744 = vld.sshfl [vmem:[#allocation1 + $0x10] sm:$0xff pattern:$0x75316420]
        %745 = vrot.lane.b32.xlu0 %v742, 112
        %v746 = vpop.permute.xlu0 %745
        %747 = vrot.lane.b32.xlu0 %v743, 112
        %v748 = vpop.permute.xlu0 %747
        %749 = vrot.lane.b32.xlu0 %v744, 112
        %v750 = vpop.permute.xlu0 %749
        %vm751 = vcmask 916480
        %v752 = vsel %vm751, %v746, %v748
        %v753 = vsel %vm751, %v748, %v750
        %v755 = vsel %vm249, %v734, 0
        %v757 = vsel %vm219, %v752, 0
        %v759 = vsel %vm219, %v753, 0
        %761 = vmatpush.msra.mxu0 0.0
        %762 = vmatpush.msra.mxu0 0.0
        %763 = vmatpush.msra.mxu0 0.0
        %764 = vmatpush.msra.mxu0 0.0
        %765 = vmatpush.msra.mxu0 0.0
        %766 = vmatpush.msra.mxu0 0.0
        %767 = vmatpush.msra.mxu0 0.0
        %768 = vmatpush.msra.mxu0 0.0
        %769 = vmatpush.msra.mxu0 0.0
        %770 = vmatpush.msra.mxu0 0.0
        %771 = vmatpush.msra.mxu0 0.0
        %772 = vmatpush.msra.mxu0 0.0
        %773 = vmatpush.msra.mxu0 0.0
        %774 = vmatpush.msra.mxu0 0.0
        %775 = vmatpush.msra.mxu0 0.0
        %776 = vmatpush.msra.mxu0 %v757
        %777 = vmatmul.f32.gmra.mxu0 %v755
        %v778 = vpop.f32.mrf.mxu0
        %v779 = vadd.f32 0.0, %v778
        %780 = vdwg.mxu0
        %781 = vmatpush.msra.mxu0 0.0
        %782 = vmatpush.msra.mxu0 0.0
        %783 = vmatpush.msra.mxu0 0.0
        %784 = vmatpush.msra.mxu0 0.0
        %785 = vmatpush.msra.mxu0 0.0
        %786 = vmatpush.msra.mxu0 0.0
        %787 = vmatpush.msra.mxu0 0.0
        %788 = vmatpush.msra.mxu0 0.0
        %789 = vmatpush.msra.mxu0 0.0
        %790 = vmatpush.msra.mxu0 0.0
        %791 = vmatpush.msra.mxu0 0.0
        %792 = vmatpush.msra.mxu0 0.0
        %793 = vmatpush.msra.mxu0 0.0
        %794 = vmatpush.msra.mxu0 0.0
        %795 = vmatpush.msra.mxu0 0.0
        %796 = vmatpush.msra.mxu0 %v759
        %797 = vmatmul.f32.gmra.mxu0 %v755
        %v798 = vpop.f32.mrf.mxu0
        %v799 = vadd.f32 0.0, %v798
        %800 = vdwg.mxu0
        %v801 = vadd.f32 %v731, %v779
        %v802 = vadd.f32 %v732, %v799
        %s803 = scalar_lea.vmem %s1, 64
        %v804 = vld [vmem:[%s803] sm:$0xff]
        %v805 = vld [vmem:[#allocation2 + $0x4] sm:$0xff]
        %v806 = vld [vmem:[#allocation2 + $0xc] sm:$0xf]
        %807 = vrot.lane.b32.xlu0 %v368, 17
        %v808 = vpop.permute.xlu0 %807
        %v809 = vrot.slane %v808, 4
        %v810 = vsel %vm311, %v809, %v808
        %v813 = vmul.f32 %v805, %v810
        %v814 = vmul.f32 %v806, %v809
        %817 = vst [vmem:[#allocation1] ss:$2 sm:$0xff] %v813
        %s818 = scalar_lea.vmem [#allocation1], 16
        %819 = vst [vmem:[%s818] ss:$2 sm:$0xff] %v814
        %v820 = vld.sshfl [vmem:[#allocation1] sm:$0xff pattern:$0x75316420]
        %v821 = vld.sshfl [vmem:[#allocation1 + $0x8] sm:$0xff pattern:$0x75316420]
        %v822 = vld.sshfl [vmem:[#allocation1 + $0x10] sm:$0xff pattern:$0x75316420]
        %823 = vrot.lane.b32.xlu0 %v820, 111
        %v824 = vpop.permute.xlu0 %823
        %825 = vrot.lane.b32.xlu0 %v821, 111
        %v826 = vpop.permute.xlu0 %825
        %827 = vrot.lane.b32.xlu0 %v822, 111
        %v828 = vpop.permute.xlu0 %827
        %v829 = vsel %vm224, %v824, %v826
        %v830 = vsel %vm224, %v826, %v828
        %v832 = vsel %vm249, %v804, 0
        %v834 = vsel %vm219, %v829, 0
        %v836 = vsel %vm219, %v830, 0
        %838 = vmatpush.msra.mxu0 0.0
        %839 = vmatpush.msra.mxu0 0.0
        %840 = vmatpush.msra.mxu0 0.0
        %841 = vmatpush.msra.mxu0 0.0
        %842 = vmatpush.msra.mxu0 0.0
        %843 = vmatpush.msra.mxu0 0.0
        %844 = vmatpush.msra.mxu0 0.0
        %845 = vmatpush.msra.mxu0 0.0
        %846 = vmatpush.msra.mxu0 0.0
        %847 = vmatpush.msra.mxu0 0.0
        %848 = vmatpush.msra.mxu0 0.0
        %849 = vmatpush.msra.mxu0 0.0
        %850 = vmatpush.msra.mxu0 0.0
        %851 = vmatpush.msra.mxu0 0.0
        %852 = vmatpush.msra.mxu0 0.0
        %853 = vmatpush.msra.mxu0 %v834
        %854 = vmatmul.f32.gmra.mxu0 %v832
        %v855 = vpop.f32.mrf.mxu0
        %v856 = vadd.f32 0.0, %v855
        %857 = vdwg.mxu0
        %858 = vmatpush.msra.mxu0 0.0
        %859 = vmatpush.msra.mxu0 0.0
        %860 = vmatpush.msra.mxu0 0.0
        %861 = vmatpush.msra.mxu0 0.0
        %862 = vmatpush.msra.mxu0 0.0
        %863 = vmatpush.msra.mxu0 0.0
        %864 = vmatpush.msra.mxu0 0.0
        %865 = vmatpush.msra.mxu0 0.0
        %866 = vmatpush.msra.mxu0 0.0
        %867 = vmatpush.msra.mxu0 0.0
        %868 = vmatpush.msra.mxu0 0.0
        %869 = vmatpush.msra.mxu0 0.0
        %870 = vmatpush.msra.mxu0 0.0
        %871 = vmatpush.msra.mxu0 0.0
        %872 = vmatpush.msra.mxu0 0.0
        %873 = vmatpush.msra.mxu0 %v836
        %874 = vmatmul.f32.gmra.mxu0 %v832
        %v875 = vpop.f32.mrf.mxu0
        %v876 = vadd.f32 0.0, %v875
        %877 = vdwg.mxu0
        %v878 = vadd.f32 %v801, %v856
        %v879 = vadd.f32 %v802, %v876
        %881 = vset.pattern.permute.xlu0 0
        %882 = vperm.xlu0 %881, %v212
        %v883 = vpop.permute.xlu0 %882
        %v885 = vadd.f32 %v878, %v883
        %v886 = vadd.f32 %v879, %v883
        %v887 = vmax.f32 %v885, 0.0
        %v888 = vmax.f32 %v886, 0.0
        %889 = vst [vmem:[%s163] sm:$0xff] %v887
        %890 = vst [vmem:[%s163 + $0x8] sm:$0xff] %v888
        %s891 = sand.u32 %s93, 1
        %s892 = scalar_lea.sflag [#allocation4], %s891
        %s893 = sand.u32 %s93, 1
        %s894 = smul.addr %s893, 16
        %s895 = scalar_lea.vmem [#allocation3], %s894
        // Predicated region
        $region33: #{tpu_custom_call.1} parent=31 // pred_check
          %p896 = pneg %p103
        $region34: #{tpu_custom_call.1} parent=31 // pred_check_branch
          %898 = sbr.rel (%p896) target = $region36
        $region35: #{tpu_custom_call.1} parent=31 // pred_region
          %900 = vsyncadd %s892, 0
          %s901 = smul.addr %s17, 2
          %s902 = smul.addr %s901, 8
          %s903 = scalar_lea.hbm %s3, %s902
          %s905 = sshll.u32 %s895, 4
          %s906 = int_to_ptr.vmem [resolvable:$true] %s905
          %s907 = sshll.u32 %s903, 4
          %s908 = int_to_ptr.hbm [resolvable:$true] %s907
          %910 = dma.vmem_to_hbm [thread:$0]  %s906, 256, %s908, %s892
        $region36: #{tpu_custom_call.1} parent=31 // pred_fallthru
          _
      $region32: #{tpu_custom_call.1} parent=5 // pred_fallthru
        _
      %p911 = scmp.le.s32.totalorder 2, %s12
      // Predicated region
      $region37: #{tpu_custom_call.1} parent=5 // pred_check
        %p912 = pneg %p911
      $region38: #{tpu_custom_call.1} parent=5 // pred_check_branch
        %914 = sbr.rel (%p912) target = $region40
      $region39: #{tpu_custom_call.1} parent=5 // pred_region
        %s915 = ssub.s32 %s12, 2
        // Predicated region
        $region41: #{tpu_custom_call.1} parent=39 // pred_check
          %p916 = pneg %p109
        $region42: #{tpu_custom_call.1} parent=39 // pred_check_branch
          %918 = sbr.rel (%p916) target = $region44
        $region43: #{tpu_custom_call.1} parent=39 // pred_region
          %s919 = sand.u32 %s94, 1
          %s920 = scalar_lea.sflag [#allocation4], %s919
          %s921 = sand.u32 %s94, 1
          %s922 = smul.addr %s921, 16
          %s923 = scalar_lea.vmem [#allocation3], %s922
          %925 = dma.done %s920, 256
        $region44: #{tpu_custom_call.1} parent=39 // pred_fallthru
          _
      $region40: #{tpu_custom_call.1} parent=5 // pred_fallthru
        _
    $region6: #{tpu_custom_call.1} parent=1 // loop_footer
      %s16 = sadd.s32 1, %s12
    $region7: #{tpu_custom_call.1} parent=1 // loop_footer_branch
      %11 = sbr.rel target = $region3
    $region8: #{tpu_custom_call.1} parent=1 // loop_exit
      _
    %926 = vsyncpa [#allocation4], 1
    %s927 = scalar_lea.sflag [#allocation4], 1
    %928 = vsyncpa %s927, 1

</llo_original>
